<compile_context>
chip_gen: v6e
topology: v6e:2x2x1
jax: 0.10.0
libtpu: 0.0.40
codegen_flags: <defaults>
</compile_context>

<pallas_src>
import jax
import jax.numpy as jnp
from jax.experimental import pallas as pl
from jax.experimental.pallas import tpu as pltpu

LANE = 128
BF16_SUBLANE = 16  # bf16 packs 16 rows per vreg


def _round_up(n, m):
    return ((n + m - 1) // m) * m


def mlp_kernel(x_ref, w1_ref, w2_ref, w3_ref, w4_ref, b_ref, o_ref):
    """Fused 4-layer MLP forward for one batch tile (all matmuls + ReLUs in-kernel)."""
    n1 = w1_ref.shape[1]
    n2 = w2_ref.shape[1]
    n3 = w3_ref.shape[1]
    n4 = w4_ref.shape[1]

    # In-kernel f32 -> bf16 cast of the input tile (no separate XLA convert / HBM pass).
    x = x_ref[...].astype(jnp.bfloat16)                           # [T, D]

    h = jnp.dot(x, w1_ref[...], preferred_element_type=jnp.float32)
    h = jnp.maximum(h + b_ref[0:1, :n1], 0.0).astype(jnp.bfloat16)

    h = jnp.dot(h, w2_ref[...], preferred_element_type=jnp.float32)
    h = jnp.maximum(h + b_ref[1:2, :n2], 0.0).astype(jnp.bfloat16)

    h = jnp.dot(h, w3_ref[...], preferred_element_type=jnp.float32)
    h = jnp.maximum(h + b_ref[2:3, :n3], 0.0).astype(jnp.bfloat16)

    out = jnp.dot(h, w4_ref[...], preferred_element_type=jnp.float32)
    out = out + b_ref[3:4, :n4]

    # Lane-dense (padded-to-128) bf16 store: unmasked vst, half the writeback bytes.
    o_ref[...] = out.astype(o_ref.dtype)


def mlp_forward(x, params, *, batch_tile=None):
    """Run the fused MLP Pallas kernel.

    x: [B, D] float32
    params: dict from init_params (bf16 padded weights, packed f32 biases).
    Returns [B, num_classes] float32 (bf16 output precision, upcast in the wrapper).
    """
    B, D = x.shape
    C = params["num_classes"]
    Hp = params["w1"].shape[1]
    L2 = params["w2"].shape[1]
    L3 = params["w3"].shape[1]
    Cp = params["w4"].shape[1]          # padded output width (multiple of 128)

    if batch_tile is None:
        if B <= 512:
            # Latency-bound regime: one grid step, 16-row aligned (bf16 sublane packing).
            batch_tile = _round_up(B, BF16_SUBLANE)
        else:
            # Throughput regime: MXU-height tiles (multiple of 256 for v6e/v7x, of 128
            # for v5e), >= 2 grid steps so v7x can shard the parallel batch axis.
            batch_tile = 256
    assert batch_tile % BF16_SUBLANE == 0, "batch_tile must be a multiple of 16"

    Bp = _round_up(B, batch_tile)
    grid = (Bp // batch_tile,)

    # Resident-VMEM footprint (weights/bias counted double-buffered, conservatively,
    # plus double-buffered x/out tiles).  Budget kept under v5e's 16 MiB default scoped
    # VMEM; vmem_limit_bytes below is sized to match on every generation.
    weight_bytes = sum(int(params[k].size) * 2 for k in ("w1", "w2", "w3", "w4"))
    bias_bytes = int(params["bias"].size) * 4
    tile_bytes = 2 * (batch_tile * D * 4 + batch_tile * Cp * 2)   # f32 x + bf16 out
    footprint = 2 * weight_bytes + 2 * bias_bytes + tile_bytes
    vmem_limit = 16 * 1024 * 1024
    assert footprint < 12 * 1024 * 1024, (
        "VMEM budget exceeded: add a K-reduction grid axis (f32 accumulator + pl.when "
        "init/finalize) or pl.Buffered(1) on the weight specs instead of shrinking "
        "batch_tile")

    x_in = x if Bp == B else jnp.pad(x, ((0, Bp - B), (0, 0)))

    flops = 2 * Bp * (D * Hp + Hp * L2 + L2 * L3 + L3 * Cp)
    bytes_accessed = Bp * D * 4 + weight_bytes + bias_bytes + Bp * Cp * 2

    def const_spec(arr):
        # Whole array resident in VMEM; constant block index -> fetched once, not per step.
        return pl.BlockSpec(arr.shape, lambda i: (0, 0))

    out = pl.pallas_call(
        mlp_kernel,
        out_shape=jax.ShapeDtypeStruct((Bp, Cp), jnp.bfloat16),
        grid_spec=pltpu.PrefetchScalarGridSpec(
            num_scalar_prefetch=0,
            grid=grid,
            in_specs=[
                pl.BlockSpec((batch_tile, D), lambda i: (i, 0)),   # x tile (f32)
                const_spec(params["w1"]),
                const_spec(params["w2"]),
                const_spec(params["w3"]),
                const_spec(params["w4"]),
                const_spec(params["bias"]),                        # packed biases (f32)
            ],
            out_specs=pl.BlockSpec((batch_tile, Cp), lambda i: (i, 0)),
        ),
        compiler_params=pltpu.CompilerParams(
            dimension_semantics=("parallel",),
            vmem_limit_bytes=vmem_limit),
        cost_estimate=pl.CostEstimate(
            flops=flops, transcendentals=0, bytes_accessed=bytes_accessed),
    )(x_in,
      params["w1"], params["w2"], params["w3"], params["w4"],
      params["bias"])

    return out[:B, :C].astype(jnp.float32)


def init_params(key, input_size, hidden_size, num_classes):
    """Deterministic parameter init mirroring the PyTorch module's __init__.

    Weights are zero-padded to 128-lane multiples and stored in bf16; the four biases
    are packed (zero-padded) into a single (8, NB) f32 array, one row per layer.
    """
    D, H, C = input_size, hidden_size, num_classes
    Hp = _round_up(H, LANE)
    L3p = _round_up(64, LANE)          # 128
    Cp = _round_up(C, LANE)
    NB = max(Hp, 128, L3p, Cp)

    ks = jax.random.split(key, 5)

    def pad2(a, shape):
        return jnp.zeros(shape, a.dtype).at[:a.shape[0], :a.shape[1]].set(a)

    # layer1/2/3 weights: torch.nn.init.ones_ (per the module spec).
    w1 = pad2(jnp.ones((D, H), jnp.float32), (D, Hp))
    w2 = pad2(jnp.ones((H, 128), jnp.float32), (Hp, 128))
    w3 = pad2(jnp.ones((128, 64), jnp.float32), (128, L3p))
    # out layer: default (kaiming-uniform-style) init, deterministic here.
    bound4 = 1.0 / jnp.sqrt(64.0)
    w4 = pad2(jax.random.uniform(ks[0], (64, C), jnp.float32, -bound4, bound4),
              (L3p, Cp))

    def uniform_bias(k, fan_in, n):
        bound = 1.0 / jnp.sqrt(fan_in)
        return jax.random.uniform(k, (n,), jnp.float32, -bound, bound)

    bias = jnp.zeros((8, NB), jnp.float32)
    bias = bias.at[0, :H].set(uniform_bias(ks[1], D, H))
    bias = bias.at[1, :128].set(uniform_bias(ks[2], H, 128))
    bias = bias.at[2, :64].set(uniform_bias(ks[3], 128, 64))
    bias = bias.at[3, :C].set(uniform_bias(ks[4], 64, C))

    return dict(
        w1=w1.astype(jnp.bfloat16),
        w2=w2.astype(jnp.bfloat16),
        w3=w3.astype(jnp.bfloat16),
        w4=w4.astype(jnp.bfloat16),
        bias=bias,
        num_classes=C,
    )


def mlp_reference(x, p):
    """Pure-JAX reference with the same bf16-weight / f32-accumulation semantics."""
    n1 = p["w1"].shape[1]
    n2 = p["w2"].shape[1]
    n3 = p["w3"].shape[1]
    n4 = p["w4"].shape[1]
    b = p["bias"]

    h = x.astype(jnp.bfloat16)
    h = jax.nn.relu(jnp.dot(h, p["w1"], preferred_element_type=jnp.float32)
                    + b[0:1, :n1]).astype(jnp.bfloat16)
    h = jax.nn.relu(jnp.dot(h, p["w2"], preferred_element_type=jnp.float32)
                    + b[1:2, :n2]).astype(jnp.bfloat16)
    h = jax.nn.relu(jnp.dot(h, p["w3"], preferred_element_type=jnp.float32)
                    + b[2:3, :n3]).astype(jnp.bfloat16)
    out = jnp.dot(h, p["w4"], preferred_element_type=jnp.float32) + b[3:4, :n4]
    return out[:, :p["num_classes"]]


if __name__ == "__main__":
    key = jax.random.PRNGKey(0)
    k_x, k_p = jax.random.split(key)

    batch, input_size, hidden_size, num_classes = 64, 32, 64, 10
    x = jax.random.normal(k_x, (batch, input_size), jnp.float32)
    params = init_params(k_p, input_size, hidden_size, num_classes)

    out = mlp_forward(x, params)
    out = jax.block_until_ready(out)
    assert out.shape == (batch, num_classes)

    ref = mlp_reference(x, params)
    # Scale-relative tolerance: ones-init makes logits large (~1e4); bf16 output rounding
    # (<= 2^-8 rel) and MXU-vs-XLA summation order are both well inside 1% of scale.
    max_err = float(jnp.max(jnp.abs(out - ref)))
    scale = float(jnp.max(jnp.abs(ref)))
    assert max_err <= 1e-2 * scale + 1e-2, (max_err, scale)

    print("KERNEL_OK")
</pallas_src>

<mosaic_0001>
module attributes {stable_mosaic.version = 11 : i64} {
  func.func @mlp_kernel(%arg0: i32, %arg1: memref<64x32xf32, #tpu.memory_space<vmem>>, %arg2: memref<32x128xbf16, #tpu.memory_space<vmem>>, %arg3: memref<128x128xbf16, #tpu.memory_space<vmem>>, %arg4: memref<128x128xbf16, #tpu.memory_space<vmem>>, %arg5: memref<128x128xbf16, #tpu.memory_space<vmem>>, %arg6: memref<8x128xf32, #tpu.memory_space<vmem>>, %arg7: memref<64x128xbf16, #tpu.memory_space<vmem>>) attributes {dimension_semantics = [#tpu.dimension_semantics<parallel>], iteration_bounds = array<i64: 1>, scalar_prefetch = 0 : i64, scratch_operands = 0 : i64, tpu.core_type = #tpu.core_type<tc>, window_params = [{transform_indices = @transform_0, window_bounds = array<i64: 64, 32>}, {pipeline_mode = #tpu.pipeline_mode<synchronous>, transform_indices = @transform_1, window_bounds = array<i64: 32, 128>}, {pipeline_mode = #tpu.pipeline_mode<synchronous>, transform_indices = @transform_2, window_bounds = array<i64: 128, 128>}, {pipeline_mode = #tpu.pipeline_mode<synchronous>, transform_indices = @transform_3, window_bounds = array<i64: 128, 128>}, {pipeline_mode = #tpu.pipeline_mode<synchronous>, transform_indices = @transform_4, window_bounds = array<i64: 128, 128>}, {pipeline_mode = #tpu.pipeline_mode<synchronous>, transform_indices = @transform_5, window_bounds = array<i64: 8, 128>}, {transform_indices = @transform_6, window_bounds = array<i64: 64, 128>}]} {
    %c0 = arith.constant 0 : index
    %c0_0 = arith.constant 0 : index
    %0 = vector.load %arg1[%c0, %c0_0] : memref<64x32xf32, #tpu.memory_space<vmem>>, vector<64x32xf32>
    %1 = arith.truncf %0 : vector<64x32xf32> to vector<64x32xbf16>
    %c0_1 = arith.constant 0 : index
    %c0_2 = arith.constant 0 : index
    %2 = vector.load %arg2[%c0_1, %c0_2] : memref<32x128xbf16, #tpu.memory_space<vmem>>, vector<32x128xbf16>
    %cst = arith.constant dense<0.000000e+00> : vector<64x128xf32>
    %3 = tpu.matmul %1, %2, %cst {dimension_numbers = #tpu.dot_dimension_numbers<[1], [0], [0], [1], [0, 0, 1, 1], [], []>} : vector<64x32xbf16>, vector<32x128xbf16>, vector<64x128xf32> -> vector<64x128xf32>
    %c0_3 = arith.constant 0 : index
    %c0_4 = arith.constant 0 : index
    %4 = vector.load %arg6[%c0_3, %c0_4] : memref<8x128xf32, #tpu.memory_space<vmem>>, vector<1x128xf32>
    %5 = vector.broadcast %4 : vector<1x128xf32> to vector<64x128xf32>
    %6 = arith.addf %3, %5 : vector<64x128xf32>
    %cst_5 = arith.constant 0.000000e+00 : f32
    %7 = vector.broadcast %cst_5 : f32 to vector<64x128xf32>
    %8 = arith.maximumf %6, %7 : vector<64x128xf32>
    %9 = arith.truncf %8 : vector<64x128xf32> to vector<64x128xbf16>
    %c0_6 = arith.constant 0 : index
    %c0_7 = arith.constant 0 : index
    %10 = vector.load %arg3[%c0_6, %c0_7] : memref<128x128xbf16, #tpu.memory_space<vmem>>, vector<128x128xbf16>
    %cst_8 = arith.constant dense<0.000000e+00> : vector<64x128xf32>
    %11 = tpu.matmul %9, %10, %cst_8 {dimension_numbers = #tpu.dot_dimension_numbers<[1], [0], [0], [1], [0, 0, 1, 1], [], []>} : vector<64x128xbf16>, vector<128x128xbf16>, vector<64x128xf32> -> vector<64x128xf32>
    %c1 = arith.constant 1 : index
    %c0_9 = arith.constant 0 : index
    %12 = vector.load %arg6[%c1, %c0_9] : memref<8x128xf32, #tpu.memory_space<vmem>>, vector<1x128xf32>
    %13 = vector.broadcast %12 : vector<1x128xf32> to vector<64x128xf32>
    %14 = arith.addf %11, %13 : vector<64x128xf32>
    %cst_10 = arith.constant 0.000000e+00 : f32
    %15 = vector.broadcast %cst_10 : f32 to vector<64x128xf32>
    %16 = arith.maximumf %14, %15 : vector<64x128xf32>
    %17 = arith.truncf %16 : vector<64x128xf32> to vector<64x128xbf16>
    %c0_11 = arith.constant 0 : index
    %c0_12 = arith.constant 0 : index
    %18 = vector.load %arg4[%c0_11, %c0_12] : memref<128x128xbf16, #tpu.memory_space<vmem>>, vector<128x128xbf16>
    %cst_13 = arith.constant dense<0.000000e+00> : vector<64x128xf32>
    %19 = tpu.matmul %17, %18, %cst_13 {dimension_numbers = #tpu.dot_dimension_numbers<[1], [0], [0], [1], [0, 0, 1, 1], [], []>} : vector<64x128xbf16>, vector<128x128xbf16>, vector<64x128xf32> -> vector<64x128xf32>
    %c2 = arith.constant 2 : index
    %c0_14 = arith.constant 0 : index
    %20 = vector.load %arg6[%c2, %c0_14] : memref<8x128xf32, #tpu.memory_space<vmem>>, vector<1x128xf32>
    %21 = vector.broadcast %20 : vector<1x128xf32> to vector<64x128xf32>
    %22 = arith.addf %19, %21 : vector<64x128xf32>
    %cst_15 = arith.constant 0.000000e+00 : f32
    %23 = vector.broadcast %cst_15 : f32 to vector<64x128xf32>
    %24 = arith.maximumf %22, %23 : vector<64x128xf32>
    %25 = arith.truncf %24 : vector<64x128xf32> to vector<64x128xbf16>
    %c0_16 = arith.constant 0 : index
    %c0_17 = arith.constant 0 : index
    %26 = vector.load %arg5[%c0_16, %c0_17] : memref<128x128xbf16, #tpu.memory_space<vmem>>, vector<128x128xbf16>
    %cst_18 = arith.constant dense<0.000000e+00> : vector<64x128xf32>
    %27 = tpu.matmul %25, %26, %cst_18 {dimension_numbers = #tpu.dot_dimension_numbers<[1], [0], [0], [1], [0, 0, 1, 1], [], []>} : vector<64x128xbf16>, vector<128x128xbf16>, vector<64x128xf32> -> vector<64x128xf32>
    %c3 = arith.constant 3 : index
    %c0_19 = arith.constant 0 : index
    %28 = vector.load %arg6[%c3, %c0_19] : memref<8x128xf32, #tpu.memory_space<vmem>>, vector<1x128xf32>
    %29 = vector.broadcast %28 : vector<1x128xf32> to vector<64x128xf32>
    %30 = arith.addf %27, %29 : vector<64x128xf32>
    %31 = arith.truncf %30 : vector<64x128xf32> to vector<64x128xbf16>
    %c0_20 = arith.constant 0 : index
    %c0_21 = arith.constant 0 : index
    %32 = vector.load %arg7[%c0_20, %c0_21] : memref<64x128xbf16, #tpu.memory_space<vmem>>, vector<64x128xbf16>
    tpu.vector_store %arg7[%c0_20, %c0_21], %31 {strides = array<i32>} : memref<64x128xbf16, #tpu.memory_space<vmem>>, vector<64x128xbf16>,
    return
  }
  func.func @transform_0(%arg0: i32) -> (i32, i32) {
    %c0_i32 = arith.constant 0 : i32
    %c0_i32_0 = arith.constant 0 : i32
    return %arg0, %c0_i32 : i32, i32
  }
  func.func @transform_1(%arg0: i32) -> (i32, i32) {
    %c0_i32 = arith.constant 0 : i32
    %c0_i32_0 = arith.constant 0 : i32
    %c0_i32_1 = arith.constant 0 : i32
    return %c0_i32, %c0_i32_0 : i32, i32
  }
  func.func @transform_2(%arg0: i32) -> (i32, i32) {
    %c0_i32 = arith.constant 0 : i32
    %c0_i32_0 = arith.constant 0 : i32
    %c0_i32_1 = arith.constant 0 : i32
    return %c0_i32, %c0_i32_0 : i32, i32
  }
  func.func @transform_3(%arg0: i32) -> (i32, i32) {
    %c0_i32 = arith.constant 0 : i32
    %c0_i32_0 = arith.constant 0 : i32
    %c0_i32_1 = arith.constant 0 : i32
    return %c0_i32, %c0_i32_0 : i32, i32
  }
  func.func @transform_4(%arg0: i32) -> (i32, i32) {
    %c0_i32 = arith.constant 0 : i32
    %c0_i32_0 = arith.constant 0 : i32
    %c0_i32_1 = arith.constant 0 : i32
    return %c0_i32, %c0_i32_0 : i32, i32
  }
  func.func @transform_5(%arg0: i32) -> (i32, i32) {
    %c0_i32 = arith.constant 0 : i32
    %c0_i32_0 = arith.constant 0 : i32
    %c0_i32_1 = arith.constant 0 : i32
    return %c0_i32, %c0_i32_0 : i32, i32
  }
  func.func @transform_6(%arg0: i32) -> (i32, i32) {
    %c0_i32 = arith.constant 0 : i32
    %c0_i32_0 = arith.constant 0 : i32
    return %arg0, %c0_i32 : i32, i32
  }
}

</mosaic_0001>

<llo_original>
// kernel: tpu_custom_call.1
$region0: #{tpu_custom_call.1}
  #allocation0 [shape = 'u32[]', space=smem, size = 0x4, offset = 0x4, fixed_abs, tag = 'smem constant byte address 0x4 - core index']
  #allocation1 [shape = 'u32[144,128]{1,0:T(1,128)}', space=vmem, size = 0x12000, scoped, tag = 'internal scratch']
  %s0 = inlined_call_operand.vmem [shape: f32[64,32], index: 0, kind: input, shape index: {}]
  %s1 = inlined_call_operand.vmem [shape: bf16[32,128], index: 1, kind: input, shape index: {}]
  %s2 = inlined_call_operand.vmem [shape: bf16[128,128], index: 2, kind: input, shape index: {}]
  %s3 = inlined_call_operand.hbm [shape: bf16[128,128], index: 3, kind: input, shape index: {}]
  %s4 = inlined_call_operand.hbm [shape: bf16[128,128], index: 4, kind: input, shape index: {}]
  %s5 = inlined_call_operand.vmem [shape: f32[8,128], index: 5, kind: input, shape index: {}]
  %s6 = inlined_call_operand.hbm [shape: bf16[64,128], index: 6, kind: output, shape index: {}]
  %s7 = sld [smem:[#allocation0]]
  $region42: #{tpu_custom_call.1} parent=0
    _
  %s9 = ssub.s32 1, %s7
  %s10 = scalar_select 0, %s9, %s7
  $region1: #{tpu_custom_call.1} parent=0
    #allocation2 [shape = 'u8[32768]{0}', space=vmem, size = 0x8000, scoped, tag = 'input window, operand 3, single buffered']
    #allocation3 [shape = 's32[1]{0}', space=sflag, size = 0x4, scoped, tag = 'scoped memory for tpu_custom_call.1']
    #allocation4 [shape = 's32[1]{0}', space=sflag, size = 0x4, scoped, tag = 'scoped memory for tpu_custom_call.1']
    #allocation5 [shape = 'u8[32768]{0}', space=vmem, size = 0x8000, scoped, tag = 'input window, operand 4, single buffered']
    #allocation6 [shape = 's32[1]{0}', space=sflag, size = 0x4, scoped, tag = 'scoped memory for tpu_custom_call.1']
    #allocation7 [shape = 'u8[16384]{0}', space=vmem, size = 0x4000, scoped, tag = 'output window, operand 0, single buffered']
    %11 = vsyncpa [#allocation3], 0
    %12 = vsyncpa [#allocation6], 0
    %13 = vsyncpa [#allocation4], 0
    // Predicated region
    $region2: #{tpu_custom_call.1} parent=1 // pred_check
      _
    $region3: #{tpu_custom_call.1} parent=1 // pred_check_branch
      %15 = sbr.rel (0) target = $region5
    $region4: #{tpu_custom_call.1} parent=1 // pred_region
      _
    $region5: #{tpu_custom_call.1} parent=1 // pred_fallthru
      _
    // Predicated region
    $region6: #{tpu_custom_call.1} parent=1 // pred_check
      _
    $region7: #{tpu_custom_call.1} parent=1 // pred_check_branch
      %17 = sbr.rel (0) target = $region9
    $region8: #{tpu_custom_call.1} parent=1 // pred_region
      _
    $region9: #{tpu_custom_call.1} parent=1 // pred_fallthru
      _
    // Predicated region
    $region10: #{tpu_custom_call.1} parent=1 // pred_check
      _
    $region11: #{tpu_custom_call.1} parent=1 // pred_check_branch
      %19 = sbr.rel (0) target = $region13
    $region12: #{tpu_custom_call.1} parent=1 // pred_region
      _
    $region13: #{tpu_custom_call.1} parent=1 // pred_fallthru
      _
    // Predicated region
    $region14: #{tpu_custom_call.1} parent=1 // pred_check
      _
    $region15: #{tpu_custom_call.1} parent=1 // pred_check_branch
      %21 = sbr.rel (0) target = $region17
    $region16: #{tpu_custom_call.1} parent=1 // pred_region
      %s23 = ssub.s32 1024, 1024
      %24 = vsyncadd [#allocation3], %s23
      %s25 = sshll.u32 [#allocation2], 4
      %s26 = int_to_ptr.vmem [resolvable:$true] %s25
      %31 = dma.hbm_to_vmem [thread:$0]  %s3, 1024, %s26, [#allocation3], 64, 64, 4
    $region17: #{tpu_custom_call.1} parent=1 // pred_fallthru
      _
    // Predicated region
    $region18: #{tpu_custom_call.1} parent=1 // pred_check
      _
    $region19: #{tpu_custom_call.1} parent=1 // pred_check_branch
      %33 = sbr.rel (0) target = $region21
    $region20: #{tpu_custom_call.1} parent=1 // pred_region
      %s35 = ssub.s32 1024, 1024
      %36 = vsyncadd [#allocation6], %s35
      %s37 = sshll.u32 [#allocation5], 4
      %s38 = int_to_ptr.vmem [resolvable:$true] %s37
      %43 = dma.hbm_to_vmem [thread:$0]  %s4, 1024, %s38, [#allocation6], 64, 64, 4
    $region21: #{tpu_custom_call.1} parent=1 // pred_fallthru
      _
    // Predicated region
    $region22: #{tpu_custom_call.1} parent=1 // pred_check
      _
    $region23: #{tpu_custom_call.1} parent=1 // pred_check_branch
      %45 = sbr.rel (0) target = $region25
    $region24: #{tpu_custom_call.1} parent=1 // pred_region
      _
    $region25: #{tpu_custom_call.1} parent=1 // pred_fallthru
      _
    // Predicated region
    $region26: #{tpu_custom_call.1} parent=1 // pred_check
      _
    $region27: #{tpu_custom_call.1} parent=1 // pred_check_branch
      %47 = sbr.rel (0) target = $region29
    $region28: #{tpu_custom_call.1} parent=1 // pred_region
      %48 = dma.done [#allocation3], 1024
    $region29: #{tpu_custom_call.1} parent=1 // pred_fallthru
      _
    // Predicated region
    $region30: #{tpu_custom_call.1} parent=1 // pred_check
      _
    $region31: #{tpu_custom_call.1} parent=1 // pred_check_branch
      %50 = sbr.rel (0) target = $region33
    $region32: #{tpu_custom_call.1} parent=1 // pred_region
      %51 = dma.done [#allocation6], 1024
    $region33: #{tpu_custom_call.1} parent=1 // pred_fallthru
      _
    %v53 = vld [vmem:[%s0] sm:$0xff]
    %v54 = vld [vmem:[%s0 + $0x8] sm:$0xff]
    %v55 = vld [vmem:[%s0 + $0x10] sm:$0xff]
    %v56 = vld [vmem:[%s0 + $0x18] sm:$0xff]
    %v57 = vld [vmem:[%s0 + $0x20] sm:$0xff]
    %v58 = vld [vmem:[%s0 + $0x28] sm:$0xff]
    %v59 = vld [vmem:[%s0 + $0x30] sm:$0xff]
    %v60 = vld [vmem:[%s0 + $0x38] sm:$0xff]
    %v61 = vpack.c.bf16 %v54, %v53
    %v62 = vpack.c.bf16 %v56, %v55
    %v63 = vpack.c.bf16 %v58, %v57
    %v64 = vpack.c.bf16 %v60, %v59
    %v65 = vld [vmem:[%s1] sm:$0xf]
    %v66 = vld [vmem:[%s1 + $0x4] sm:$0xf]
    %v67 = vld [vmem:[%s1 + $0x8] sm:$0xf]
    %v68 = vld [vmem:[%s1 + $0xc] sm:$0xf]
    %v69 = vld [vmem:[%s5] sm:$0x1]
    %v70 = vlaneseq
    %v71 = vshrl.u32 %v70, 7
    %v72 = vsub.s32 0, %v71
    %v73 = vrot.slane %v69, %v72
    %v78 = vunpack.c.l.b16 %v65
    %v79 = vunpack.c.l.b16 %v66
    %v80 = vunpack.c.l.b16 %v67
    %v81 = vunpack.c.l.b16 %v68
    %v82 = vpack.c.b16 %v79, %v78
    %v83 = vpack.c.b16 %v81, %v80
    %vm86 = vcmask 261120
    %v88 = vsel %vm86, %v61, 0
    %v91 = vsel %vm86, %v62, 0
    %v94 = vsel %vm86, %v63, 0
    %v97 = vsel %vm86, %v64, 0
    %99 = vmatprep.subr.bf16.mxu0 0
    %100 = vmatpush1.bf16.msra.mxu0 0
    %101 = vmatprep.subr.bf16.mxu0 0
    %102 = vmatpush1.bf16.msra.mxu0 0
    %103 = vmatprep.subr.bf16.mxu0 0
    %104 = vmatpush1.bf16.msra.mxu0 0
    %105 = vmatprep.subr.bf16.mxu0 0
    %106 = vmatpush1.bf16.msra.mxu0 0
    %107 = vmatprep.subr.bf16.mxu0 0
    %108 = vmatpush1.bf16.msra.mxu0 0
    %109 = vmatprep.subr.bf16.mxu0 0
    %110 = vmatpush1.bf16.msra.mxu0 0
    %111 = vmatprep.subr.bf16.mxu0 0
    %112 = vmatpush1.bf16.msra.mxu0 %v83
    %113 = vmatprep.subr.bf16.mxu0 0
    %114 = vmatpush1.bf16.msra.mxu0 %v82
    %115 = vmatprep.subr.bf16.mxu0 0
    %116 = vmatpush2.bf16.msra.mxu0 0
    %117 = vmatprep.subr.bf16.mxu0 0
    %118 = vmatpush2.bf16.msra.mxu0 0
    %119 = vmatprep.subr.bf16.mxu0 0
    %120 = vmatpush2.bf16.msra.mxu0 0
    %121 = vmatprep.subr.bf16.mxu0 0
    %122 = vmatpush2.bf16.msra.mxu0 0
    %123 = vmatprep.subr.bf16.mxu0 0
    %124 = vmatpush2.bf16.msra.mxu0 0
    %125 = vmatprep.subr.bf16.mxu0 0
    %126 = vmatpush2.bf16.msra.mxu0 0
    %127 = vmatprep.subr.bf16.mxu0 0
    %128 = vmatpush2.bf16.msra.mxu0 0
    %129 = vmatprep.subr.bf16.mxu0 0
    %130 = vmatpush2.bf16.msra.mxu0 0
    %131 = vmatprep.mubr.bf16.mxu0 0
    %132 = vmatmul.mubr.bf16.gmra.mxu0 %v88
    %v133 = vpop.f32.mrf.mxu0
    %v134 = vadd.f32 %v73, %v133
    %v135 = vpop.f32.mrf.mxu0
    %v136 = vpop.f32.mrf.mxu0
    %v137 = vadd.f32 %v73, %v136
    %v138 = vpop.f32.mrf.mxu0
    %139 = vmatprep.mubr.bf16.mxu0 0
    %140 = vmatmul.mubr.bf16.gmra.mxu0 %v91
    %v141 = vpop.f32.mrf.mxu0
    %v142 = vadd.f32 %v73, %v141
    %v143 = vpop.f32.mrf.mxu0
    %v144 = vpop.f32.mrf.mxu0
    %v145 = vadd.f32 %v73, %v144
    %v146 = vpop.f32.mrf.mxu0
    %147 = vmatprep.mubr.bf16.mxu0 0
    %148 = vmatmul.mubr.bf16.gmra.mxu0 %v94
    %v149 = vpop.f32.mrf.mxu0
    %v150 = vadd.f32 %v73, %v149
    %v151 = vpop.f32.mrf.mxu0
    %v152 = vpop.f32.mrf.mxu0
    %v153 = vadd.f32 %v73, %v152
    %v154 = vpop.f32.mrf.mxu0
    %155 = vmatprep.mubr.bf16.mxu0 0
    %156 = vmatmul.mubr.bf16.gmra.mxu0 %v97
    %v157 = vpop.f32.mrf.mxu0
    %v158 = vadd.f32 %v73, %v157
    %v159 = vpop.f32.mrf.mxu0
    %v160 = vpop.f32.mrf.mxu0
    %v161 = vadd.f32 %v73, %v160
    %v162 = vpop.f32.mrf.mxu0
    %163 = vdwg.mxu0
    %v164 = vmax.f32 %v134, 0.0
    %v165 = vmax.f32 %v137, 0.0
    %v166 = vmax.f32 %v142, 0.0
    %v167 = vmax.f32 %v145, 0.0
    %v168 = vmax.f32 %v150, 0.0
    %v169 = vmax.f32 %v153, 0.0
    %v170 = vmax.f32 %v158, 0.0
    %v171 = vmax.f32 %v161, 0.0
    %v172 = vpack.c.bf16 %v165, %v164
    %v173 = vpack.c.bf16 %v167, %v166
    %v174 = vpack.c.bf16 %v169, %v168
    %v175 = vpack.c.bf16 %v171, %v170
    %v176 = vld [vmem:[%s2] sm:$0xf]
    %v177 = vld [vmem:[%s2 + $0x4] sm:$0xf]
    %v178 = vld [vmem:[%s2 + $0x8] sm:$0xf]
    %v179 = vld [vmem:[%s2 + $0xc] sm:$0xf]
    %v180 = vld [vmem:[%s2 + $0x10] sm:$0xf]
    %v181 = vld [vmem:[%s2 + $0x14] sm:$0xf]
    %v182 = vld [vmem:[%s2 + $0x18] sm:$0xf]
    %v183 = vld [vmem:[%s2 + $0x1c] sm:$0xf]
    %v184 = vld [vmem:[%s2 + $0x20] sm:$0xf]
    %v185 = vld [vmem:[%s2 + $0x24] sm:$0xf]
    %v186 = vld [vmem:[%s2 + $0x28] sm:$0xf]
    %v187 = vld [vmem:[%s2 + $0x2c] sm:$0xf]
    %v188 = vld [vmem:[%s2 + $0x30] sm:$0xf]
    %v189 = vld [vmem:[%s2 + $0x34] sm:$0xf]
    %v190 = vld [vmem:[%s2 + $0x38] sm:$0xf]
    %v191 = vld [vmem:[%s2 + $0x3c] sm:$0xf]
    %v192 = vld [vmem:[%s5 + $0x1] sm:$0x1]
    %v193 = vlaneseq
    %v194 = vshrl.u32 %v193, 7
    %v195 = vsub.s32 0, %v194
    %v196 = vrot.slane %v192, %v195
    %v213 = vunpack.c.l.b16 %v176
    %v214 = vunpack.c.l.b16 %v177
    %v215 = vunpack.c.l.b16 %v178
    %v216 = vunpack.c.l.b16 %v179
    %v217 = vunpack.c.l.b16 %v180
    %v218 = vunpack.c.l.b16 %v181
    %v219 = vunpack.c.l.b16 %v182
    %v220 = vunpack.c.l.b16 %v183
    %v221 = vunpack.c.l.b16 %v184
    %v222 = vunpack.c.l.b16 %v185
    %v223 = vunpack.c.l.b16 %v186
    %v224 = vunpack.c.l.b16 %v187
    %v225 = vunpack.c.l.b16 %v188
    %v226 = vunpack.c.l.b16 %v189
    %v227 = vunpack.c.l.b16 %v190
    %v228 = vunpack.c.l.b16 %v191
    %v229 = vpack.c.b16 %v214, %v213
    %v230 = vpack.c.b16 %v216, %v215
    %v231 = vpack.c.b16 %v218, %v217
    %v232 = vpack.c.b16 %v220, %v219
    %v233 = vpack.c.b16 %v222, %v221
    %v234 = vpack.c.b16 %v224, %v223
    %v235 = vpack.c.b16 %v226, %v225
    %v236 = vpack.c.b16 %v228, %v227
    %245 = vmatprep.subr.bf16.mxu0 0
    %246 = vmatpush1.bf16.msra.mxu0 %v236
    %247 = vmatprep.subr.bf16.mxu0 0
    %248 = vmatpush1.bf16.msra.mxu0 %v235
    %249 = vmatprep.subr.bf16.mxu0 0
    %250 = vmatpush1.bf16.msra.mxu0 %v234
    %251 = vmatprep.subr.bf16.mxu0 0
    %252 = vmatpush1.bf16.msra.mxu0 %v233
    %253 = vmatprep.subr.bf16.mxu0 0
    %254 = vmatpush1.bf16.msra.mxu0 %v232
    %255 = vmatprep.subr.bf16.mxu0 0
    %256 = vmatpush1.bf16.msra.mxu0 %v231
    %257 = vmatprep.subr.bf16.mxu0 0
    %258 = vmatpush1.bf16.msra.mxu0 %v230
    %259 = vmatprep.subr.bf16.mxu0 0
    %260 = vmatpush1.bf16.msra.mxu0 %v229
    %261 = vmatprep.subr.bf16.mxu0 0
    %262 = vmatpush2.bf16.msra.mxu0 0
    %263 = vmatprep.subr.bf16.mxu0 0
    %264 = vmatpush2.bf16.msra.mxu0 0
    %265 = vmatprep.subr.bf16.mxu0 0
    %266 = vmatpush2.bf16.msra.mxu0 0
    %267 = vmatprep.subr.bf16.mxu0 0
    %268 = vmatpush2.bf16.msra.mxu0 0
    %269 = vmatprep.subr.bf16.mxu0 0
    %270 = vmatpush2.bf16.msra.mxu0 0
    %271 = vmatprep.subr.bf16.mxu0 0
    %272 = vmatpush2.bf16.msra.mxu0 0
    %273 = vmatprep.subr.bf16.mxu0 0
    %274 = vmatpush2.bf16.msra.mxu0 0
    %275 = vmatprep.subr.bf16.mxu0 0
    %276 = vmatpush2.bf16.msra.mxu0 0
    %277 = vmatprep.mubr.bf16.mxu0 0
    %278 = vmatmul.mubr.bf16.gmra.mxu0 %v172
    %v279 = vpop.f32.mrf.mxu0
    %v280 = vadd.f32 %v196, %v279
    %v281 = vpop.f32.mrf.mxu0
    %v282 = vpop.f32.mrf.mxu0
    %v283 = vadd.f32 %v196, %v282
    %v284 = vpop.f32.mrf.mxu0
    %285 = vmatprep.mubr.bf16.mxu0 0
    %286 = vmatmul.mubr.bf16.gmra.mxu0 %v173
    %v287 = vpop.f32.mrf.mxu0
    %v288 = vadd.f32 %v196, %v287
    %v289 = vpop.f32.mrf.mxu0
    %v290 = vpop.f32.mrf.mxu0
    %v291 = vadd.f32 %v196, %v290
    %v292 = vpop.f32.mrf.mxu0
    %293 = vmatprep.mubr.bf16.mxu0 0
    %294 = vmatmul.mubr.bf16.gmra.mxu0 %v174
    %v295 = vpop.f32.mrf.mxu0
    %v296 = vadd.f32 %v196, %v295
    %v297 = vpop.f32.mrf.mxu0
    %v298 = vpop.f32.mrf.mxu0
    %v299 = vadd.f32 %v196, %v298
    %v300 = vpop.f32.mrf.mxu0
    %301 = vmatprep.mubr.bf16.mxu0 0
    %302 = vmatmul.mubr.bf16.gmra.mxu0 %v175
    %v303 = vpop.f32.mrf.mxu0
    %v304 = vadd.f32 %v196, %v303
    %v305 = vpop.f32.mrf.mxu0
    %v306 = vpop.f32.mrf.mxu0
    %v307 = vadd.f32 %v196, %v306
    %v308 = vpop.f32.mrf.mxu0
    %309 = vdwg.mxu0
    %v310 = vmax.f32 %v280, 0.0
    %v311 = vmax.f32 %v283, 0.0
    %v312 = vmax.f32 %v288, 0.0
    %v313 = vmax.f32 %v291, 0.0
    %v314 = vmax.f32 %v296, 0.0
    %v315 = vmax.f32 %v299, 0.0
    %v316 = vmax.f32 %v304, 0.0
    %v317 = vmax.f32 %v307, 0.0
    %v318 = vpack.c.bf16 %v311, %v310
    %v319 = vpack.c.bf16 %v313, %v312
    %v320 = vpack.c.bf16 %v315, %v314
    %v321 = vpack.c.bf16 %v317, %v316
    %v322 = vld [vmem:[#allocation2] sm:$0xf]
    %v323 = vld [vmem:[#allocation2 + $0x4] sm:$0xf]
    %v324 = vld [vmem:[#allocation2 + $0x8] sm:$0xf]
    %v325 = vld [vmem:[#allocation2 + $0xc] sm:$0xf]
    %v326 = vld [vmem:[#allocation2 + $0x10] sm:$0xf]
    %v327 = vld [vmem:[#allocation2 + $0x14] sm:$0xf]
    %v328 = vld [vmem:[#allocation2 + $0x18] sm:$0xf]
    %v329 = vld [vmem:[#allocation2 + $0x1c] sm:$0xf]
    %v330 = vld [vmem:[#allocation2 + $0x20] sm:$0xf]
    %v331 = vld [vmem:[#allocation2 + $0x24] sm:$0xf]
    %v332 = vld [vmem:[#allocation2 + $0x28] sm:$0xf]
    %v333 = vld [vmem:[#allocation2 + $0x2c] sm:$0xf]
    %v334 = vld [vmem:[#allocation2 + $0x30] sm:$0xf]
    %v335 = vld [vmem:[#allocation2 + $0x34] sm:$0xf]
    %v336 = vld [vmem:[#allocation2 + $0x38] sm:$0xf]
    %v337 = vld [vmem:[#allocation2 + $0x3c] sm:$0xf]
    %v338 = vld [vmem:[%s5 + $0x2] sm:$0x1]
    %v339 = vlaneseq
    %v340 = vshrl.u32 %v339, 7
    %v341 = vsub.s32 0, %v340
    %v342 = vrot.slane %v338, %v341
    %v359 = vunpack.c.l.b16 %v322
    %v360 = vunpack.c.l.b16 %v323
    %v361 = vunpack.c.l.b16 %v324
    %v362 = vunpack.c.l.b16 %v325
    %v363 = vunpack.c.l.b16 %v326
    %v364 = vunpack.c.l.b16 %v327
    %v365 = vunpack.c.l.b16 %v328
    %v366 = vunpack.c.l.b16 %v329
    %v367 = vunpack.c.l.b16 %v330
    %v368 = vunpack.c.l.b16 %v331
    %v369 = vunpack.c.l.b16 %v332
    %v370 = vunpack.c.l.b16 %v333
    %v371 = vunpack.c.l.b16 %v334
    %v372 = vunpack.c.l.b16 %v335
    %v373 = vunpack.c.l.b16 %v336
    %v374 = vunpack.c.l.b16 %v337
    %v375 = vpack.c.b16 %v360, %v359
    %v376 = vpack.c.b16 %v362, %v361
    %v377 = vpack.c.b16 %v364, %v363
    %v378 = vpack.c.b16 %v366, %v365
    %v379 = vpack.c.b16 %v368, %v367
    %v380 = vpack.c.b16 %v370, %v369
    %v381 = vpack.c.b16 %v372, %v371
    %v382 = vpack.c.b16 %v374, %v373
    %391 = vmatprep.subr.bf16.mxu0 0
    %392 = vmatpush1.bf16.msra.mxu0 %v382
    %393 = vmatprep.subr.bf16.mxu0 0
    %394 = vmatpush1.bf16.msra.mxu0 %v381
    %395 = vmatprep.subr.bf16.mxu0 0
    %396 = vmatpush1.bf16.msra.mxu0 %v380
    %397 = vmatprep.subr.bf16.mxu0 0
    %398 = vmatpush1.bf16.msra.mxu0 %v379
    %399 = vmatprep.subr.bf16.mxu0 0
    %400 = vmatpush1.bf16.msra.mxu0 %v378
    %401 = vmatprep.subr.bf16.mxu0 0
    %402 = vmatpush1.bf16.msra.mxu0 %v377
    %403 = vmatprep.subr.bf16.mxu0 0
    %404 = vmatpush1.bf16.msra.mxu0 %v376
    %405 = vmatprep.subr.bf16.mxu0 0
    %406 = vmatpush1.bf16.msra.mxu0 %v375
    %407 = vmatprep.subr.bf16.mxu0 0
    %408 = vmatpush2.bf16.msra.mxu0 0
    %409 = vmatprep.subr.bf16.mxu0 0
    %410 = vmatpush2.bf16.msra.mxu0 0
    %411 = vmatprep.subr.bf16.mxu0 0
    %412 = vmatpush2.bf16.msra.mxu0 0
    %413 = vmatprep.subr.bf16.mxu0 0
    %414 = vmatpush2.bf16.msra.mxu0 0
    %415 = vmatprep.subr.bf16.mxu0 0
    %416 = vmatpush2.bf16.msra.mxu0 0
    %417 = vmatprep.subr.bf16.mxu0 0
    %418 = vmatpush2.bf16.msra.mxu0 0
    %419 = vmatprep.subr.bf16.mxu0 0
    %420 = vmatpush2.bf16.msra.mxu0 0
    %421 = vmatprep.subr.bf16.mxu0 0
    %422 = vmatpush2.bf16.msra.mxu0 0
    %423 = vmatprep.mubr.bf16.mxu0 0
    %424 = vmatmul.mubr.bf16.gmra.mxu0 %v318
    %v425 = vpop.f32.mrf.mxu0
    %v426 = vadd.f32 %v342, %v425
    %v427 = vpop.f32.mrf.mxu0
    %v428 = vpop.f32.mrf.mxu0
    %v429 = vadd.f32 %v342, %v428
    %v430 = vpop.f32.mrf.mxu0
    %431 = vmatprep.mubr.bf16.mxu0 0
    %432 = vmatmul.mubr.bf16.gmra.mxu0 %v319
    %v433 = vpop.f32.mrf.mxu0
    %v434 = vadd.f32 %v342, %v433
    %v435 = vpop.f32.mrf.mxu0
    %v436 = vpop.f32.mrf.mxu0
    %v437 = vadd.f32 %v342, %v436
    %v438 = vpop.f32.mrf.mxu0
    %439 = vmatprep.mubr.bf16.mxu0 0
    %440 = vmatmul.mubr.bf16.gmra.mxu0 %v320
    %v441 = vpop.f32.mrf.mxu0
    %v442 = vadd.f32 %v342, %v441
    %v443 = vpop.f32.mrf.mxu0
    %v444 = vpop.f32.mrf.mxu0
    %v445 = vadd.f32 %v342, %v444
    %v446 = vpop.f32.mrf.mxu0
    %447 = vmatprep.mubr.bf16.mxu0 0
    %448 = vmatmul.mubr.bf16.gmra.mxu0 %v321
    %v449 = vpop.f32.mrf.mxu0
    %v450 = vadd.f32 %v342, %v449
    %v451 = vpop.f32.mrf.mxu0
    %v452 = vpop.f32.mrf.mxu0
    %v453 = vadd.f32 %v342, %v452
    %v454 = vpop.f32.mrf.mxu0
    %455 = vdwg.mxu0
    %v456 = vmax.f32 %v426, 0.0
    %v457 = vmax.f32 %v429, 0.0
    %v458 = vmax.f32 %v434, 0.0
    %v459 = vmax.f32 %v437, 0.0
    %v460 = vmax.f32 %v442, 0.0
    %v461 = vmax.f32 %v445, 0.0
    %v462 = vmax.f32 %v450, 0.0
    %v463 = vmax.f32 %v453, 0.0
    %v464 = vpack.c.bf16 %v457, %v456
    %v465 = vpack.c.bf16 %v459, %v458
    %v466 = vpack.c.bf16 %v461, %v460
    %v467 = vpack.c.bf16 %v463, %v462
    %v468 = vld [vmem:[#allocation5] sm:$0xf]
    %v469 = vld [vmem:[#allocation5 + $0x4] sm:$0xf]
    %v470 = vld [vmem:[#allocation5 + $0x8] sm:$0xf]
    %v471 = vld [vmem:[#allocation5 + $0xc] sm:$0xf]
    %v472 = vld [vmem:[#allocation5 + $0x10] sm:$0xf]
    %v473 = vld [vmem:[#allocation5 + $0x14] sm:$0xf]
    %v474 = vld [vmem:[#allocation5 + $0x18] sm:$0xf]
    %v475 = vld [vmem:[#allocation5 + $0x1c] sm:$0xf]
    %v476 = vld [vmem:[#allocation5 + $0x20] sm:$0xf]
    %v477 = vld [vmem:[#allocation5 + $0x24] sm:$0xf]
    %v478 = vld [vmem:[#allocation5 + $0x28] sm:$0xf]
    %v479 = vld [vmem:[#allocation5 + $0x2c] sm:$0xf]
    %v480 = vld [vmem:[#allocation5 + $0x30] sm:$0xf]
    %v481 = vld [vmem:[#allocation5 + $0x34] sm:$0xf]
    %v482 = vld [vmem:[#allocation5 + $0x38] sm:$0xf]
    %v483 = vld [vmem:[#allocation5 + $0x3c] sm:$0xf]
    %v484 = vld [vmem:[%s5 + $0x3] sm:$0x1]
    %v485 = vlaneseq
    %v486 = vshrl.u32 %v485, 7
    %v487 = vsub.s32 0, %v486
    %v488 = vrot.slane %v484, %v487
    %v505 = vunpack.c.l.b16 %v468
    %v506 = vunpack.c.l.b16 %v469
    %v507 = vunpack.c.l.b16 %v470
    %v508 = vunpack.c.l.b16 %v471
    %v509 = vunpack.c.l.b16 %v472
    %v510 = vunpack.c.l.b16 %v473
    %v511 = vunpack.c.l.b16 %v474
    %v512 = vunpack.c.l.b16 %v475
    %v513 = vunpack.c.l.b16 %v476
    %v514 = vunpack.c.l.b16 %v477
    %v515 = vunpack.c.l.b16 %v478
    %v516 = vunpack.c.l.b16 %v479
    %v517 = vunpack.c.l.b16 %v480
    %v518 = vunpack.c.l.b16 %v481
    %v519 = vunpack.c.l.b16 %v482
    %v520 = vunpack.c.l.b16 %v483
    %v521 = vpack.c.b16 %v506, %v505
    %v522 = vpack.c.b16 %v508, %v507
    %v523 = vpack.c.b16 %v510, %v509
    %v524 = vpack.c.b16 %v512, %v511
    %v525 = vpack.c.b16 %v514, %v513
    %v526 = vpack.c.b16 %v516, %v515
    %v527 = vpack.c.b16 %v518, %v517
    %v528 = vpack.c.b16 %v520, %v519
    %537 = vmatprep.subr.bf16.mxu0 0
    %538 = vmatpush1.bf16.msra.mxu0 %v528
    %539 = vmatprep.subr.bf16.mxu0 0
    %540 = vmatpush1.bf16.msra.mxu0 %v527
    %541 = vmatprep.subr.bf16.mxu0 0
    %542 = vmatpush1.bf16.msra.mxu0 %v526
    %543 = vmatprep.subr.bf16.mxu0 0
    %544 = vmatpush1.bf16.msra.mxu0 %v525
    %545 = vmatprep.subr.bf16.mxu0 0
    %546 = vmatpush1.bf16.msra.mxu0 %v524
    %547 = vmatprep.subr.bf16.mxu0 0
    %548 = vmatpush1.bf16.msra.mxu0 %v523
    %549 = vmatprep.subr.bf16.mxu0 0
    %550 = vmatpush1.bf16.msra.mxu0 %v522
    %551 = vmatprep.subr.bf16.mxu0 0
    %552 = vmatpush1.bf16.msra.mxu0 %v521
    %553 = vmatprep.subr.bf16.mxu0 0
    %554 = vmatpush2.bf16.msra.mxu0 0
    %555 = vmatprep.subr.bf16.mxu0 0
    %556 = vmatpush2.bf16.msra.mxu0 0
    %557 = vmatprep.subr.bf16.mxu0 0
    %558 = vmatpush2.bf16.msra.mxu0 0
    %559 = vmatprep.subr.bf16.mxu0 0
    %560 = vmatpush2.bf16.msra.mxu0 0
    %561 = vmatprep.subr.bf16.mxu0 0
    %562 = vmatpush2.bf16.msra.mxu0 0
    %563 = vmatprep.subr.bf16.mxu0 0
    %564 = vmatpush2.bf16.msra.mxu0 0
    %565 = vmatprep.subr.bf16.mxu0 0
    %566 = vmatpush2.bf16.msra.mxu0 0
    %567 = vmatprep.subr.bf16.mxu0 0
    %568 = vmatpush2.bf16.msra.mxu0 0
    %569 = vmatprep.mubr.bf16.mxu0 0
    %570 = vmatmul.mubr.bf16.gmra.mxu0 %v464
    %v571 = vpop.f32.mrf.mxu0
    %v572 = vadd.f32 %v488, %v571
    %v573 = vpop.f32.mrf.mxu0
    %v574 = vpop.f32.mrf.mxu0
    %v575 = vadd.f32 %v488, %v574
    %v576 = vpop.f32.mrf.mxu0
    %577 = vmatprep.mubr.bf16.mxu0 0
    %578 = vmatmul.mubr.bf16.gmra.mxu0 %v465
    %v579 = vpop.f32.mrf.mxu0
    %v580 = vadd.f32 %v488, %v579
    %v581 = vpop.f32.mrf.mxu0
    %v582 = vpop.f32.mrf.mxu0
    %v583 = vadd.f32 %v488, %v582
    %v584 = vpop.f32.mrf.mxu0
    %585 = vmatprep.mubr.bf16.mxu0 0
    %586 = vmatmul.mubr.bf16.gmra.mxu0 %v466
    %v587 = vpop.f32.mrf.mxu0
    %v588 = vadd.f32 %v488, %v587
    %v589 = vpop.f32.mrf.mxu0
    %v590 = vpop.f32.mrf.mxu0
    %v591 = vadd.f32 %v488, %v590
    %v592 = vpop.f32.mrf.mxu0
    %593 = vmatprep.mubr.bf16.mxu0 0
    %594 = vmatmul.mubr.bf16.gmra.mxu0 %v467
    %v595 = vpop.f32.mrf.mxu0
    %v596 = vadd.f32 %v488, %v595
    %v597 = vpop.f32.mrf.mxu0
    %v598 = vpop.f32.mrf.mxu0
    %v599 = vadd.f32 %v488, %v598
    %v600 = vpop.f32.mrf.mxu0
    %601 = vdwg.mxu0
    %v602 = vpack.c.bf16 %v575, %v572
    %v603 = vpack.c.bf16 %v583, %v580
    %v604 = vpack.c.bf16 %v591, %v588
    %v605 = vpack.c.bf16 %v599, %v596
    %v610 = vunpack.c.l.b16 %v602
    %v611 = vunpack.c.h.b16 %v602
    %v612 = vunpack.c.l.b16 %v603
    %v613 = vunpack.c.h.b16 %v603
    %v614 = vunpack.c.l.b16 %v604
    %v615 = vunpack.c.h.b16 %v604
    %v616 = vunpack.c.l.b16 %v605
    %v617 = vunpack.c.h.b16 %v605
    %v618 = vpack.c.b16 %v610, %v610
    %v619 = vpack.c.b16 %v611, %v611
    %v620 = vpack.c.b16 %v612, %v612
    %v621 = vpack.c.b16 %v613, %v613
    %v622 = vpack.c.b16 %v614, %v614
    %v623 = vpack.c.b16 %v615, %v615
    %v624 = vpack.c.b16 %v616, %v616
    %v625 = vpack.c.b16 %v617, %v617
    %634 = vst [vmem:[#allocation7] sm:$0xf] %v618
    %635 = vst [vmem:[#allocation7 + $0x4] sm:$0xf] %v619
    %636 = vst [vmem:[#allocation7 + $0x8] sm:$0xf] %v620
    %637 = vst [vmem:[#allocation7 + $0xc] sm:$0xf] %v621
    %638 = vst [vmem:[#allocation7 + $0x10] sm:$0xf] %v622
    %639 = vst [vmem:[#allocation7 + $0x14] sm:$0xf] %v623
    %640 = vst [vmem:[#allocation7 + $0x18] sm:$0xf] %v624
    %641 = vst [vmem:[#allocation7 + $0x1c] sm:$0xf] %v625
    // Predicated region
    $region34: #{tpu_custom_call.1} parent=1 // pred_check
      _
    $region35: #{tpu_custom_call.1} parent=1 // pred_check_branch
      %643 = sbr.rel (0) target = $region37
    $region36: #{tpu_custom_call.1} parent=1 // pred_region
      %s645 = ssub.s32 512, 512
      %646 = vsyncadd [#allocation4], %s645
      %s647 = sshll.u32 [#allocation7], 4
      %s648 = int_to_ptr.vmem [resolvable:$true] %s647
      %653 = dma.vmem_to_hbm [thread:$0]  %s648, 512, %s6, [#allocation4], 64, 64, 4
    $region37: #{tpu_custom_call.1} parent=1 // pred_fallthru
      _
    // Predicated region
    $region38: #{tpu_custom_call.1} parent=1 // pred_check
      _
    $region39: #{tpu_custom_call.1} parent=1 // pred_check_branch
      %655 = sbr.rel (0) target = $region41
    $region40: #{tpu_custom_call.1} parent=1 // pred_region
      %656 = dma.done [#allocation4], 512
    $region41: #{tpu_custom_call.1} parent=1 // pred_fallthru
      _
    %657 = vsyncpa [#allocation3], 1
    %658 = vsyncpa [#allocation6], 1
    %659 = vsyncpa [#allocation4], 1

</llo_original>
